<compile_context>
chip_gen: v5e
topology: v5e:2x2
jax: 0.10.0
libtpu: 0.0.40
codegen_flags: <defaults>
</compile_context>

<pallas_src>
import functools
import math

import jax
import jax.numpy as jnp
from jax.experimental import pallas as pl
from jax.experimental.pallas import tpu as pltpu

_LANE = 128
_SUB = 8
_TILE = _LANE * _SUB  # 1024: smallest lane+sublane dense M tile


def _round_up(v, q):
    return ((v + q - 1) // q) * q


def _linear_clamp_kernel(w_ref, b_ref, xt_ref, ot_ref, *,
                         n_out, k_in, min_value, max_value):
    # w_ref: (N, K) in SMEM     b_ref: (N,) in SMEM
    # xt_ref: (K, G, 128) VMEM  ot_ref: (N, G, 128) VMEM   (G = tm // 128, mult of 8)
    # Each xt_ref[k] / ot_ref[n] is a dense (G, 128) slab -> full vreg fill,
    # unmasked vld / vst on all generations (critical on v5e's single store slot).
    x_rows = [xt_ref[k].astype(jnp.float32) for k in range(k_in)]
    for n in range(n_out):
        acc = x_rows[0] * w_ref[n, 0] + b_ref[n]
        for k in range(1, k_in):
            acc = acc + x_rows[k] * w_ref[n, k]
        # torch.clamp_min then torch.clamp_max
        acc = jnp.maximum(acc, min_value)
        acc = jnp.minimum(acc, max_value)
        ot_ref[n] = acc.astype(ot_ref.dtype)


def linear_clamp(x, weight, bias, min_value, max_value, *,
                 tm_max=262144, min_pallas_m=8192, use_pallas=None):
    """x: (..., K); weight: (N, K); bias: (N,). Returns clamp(x @ W^T + b)."""
    *lead, k = x.shape
    n = weight.shape[0]
    m = math.prod(lead) if lead else 1

    if use_pallas is None:
        use_pallas = m >= min_pallas_m
    if not use_pallas:
        # Small-M fast path: launch/pad/transpose overhead would dominate a kernel.
        y = x @ weight.T + bias
        y = jnp.maximum(y, min_value)
        y = jnp.minimum(y, max_value)
        return y

    # ---- tile selection -----------------------------------------------------
    # tm is a multiple of 1024 so G = tm//128 is a multiple of 8 (sublane dense).
    m_q = _round_up(m, _TILE)
    tm = min(_round_up(tm_max, _TILE), m_q)
    if m_q // tm < 2 and m_q > _TILE:
        # Keep >= 2 grid steps so the "parallel" M axis can actually be sharded
        # across v7x's two TensorCores.
        tm = _round_up((m_q + 1) // 2, _TILE)
    m_pad = _round_up(m, tm)
    g = tm // _LANE

    # ---- wrapper-side layout plumbing ---------------------------------------
    # Batch goes on (sublane, lane): present x as (K, m_pad//128, 128).
    # TODO(synk): this transpose+pad is one extra HBM copy of x; consuming the native
    # interleaved (M, K) layout in-kernel would remove it.
    x2d = x.reshape(m, k)
    xt = jnp.pad(x2d.T, ((0, 0), (0, m_pad - m)))          # (K, m_pad)
    xt3 = xt.reshape(k, m_pad // _LANE, _LANE)              # free contiguous reshape

    kern = functools.partial(
        _linear_clamp_kernel,
        n_out=n,
        k_in=k,
        min_value=float(min_value),   # Python floats -> VPU immediates
        max_value=float(max_value),
    )

    out3 = pl.pallas_call(
        kern,
        out_shape=jax.ShapeDtypeStruct((n, m_pad // _LANE, _LANE), x.dtype),
        grid=(m_pad // tm,),
        in_specs=[
            pl.BlockSpec(memory_space=pltpu.MemorySpace.SMEM),   # weight (N, K)
            pl.BlockSpec(memory_space=pltpu.MemorySpace.SMEM),   # bias   (N,)
            pl.BlockSpec((k, g, _LANE), lambda i: (0, i, 0)),    # x^T tile
        ],
        out_specs=pl.BlockSpec((n, g, _LANE), lambda i: (0, i, 0)),
        compiler_params=pltpu.CompilerParams(
            dimension_semantics=("parallel",),        # shard M across TCs on v7x
            vmem_limit_bytes=32 * 1024 * 1024,        # 40*tm ~= 10 MiB double-buffered
        ),
    )(weight, bias, xt3)

    # Back to PyTorch layout (..., N); drop the padding (single remaining transpose).
    out_t = out3.reshape(n, m_pad)[:, :m]
    return out_t.T.reshape(*lead, n)


if __name__ == "__main__":
    key = jax.random.PRNGKey(0)
    k_w, k_b, k1, k2, k3 = jax.random.split(key, 5)

    # nn.Linear(2, 3): in_features=2, out_features=3
    in_features, out_features = 2, 3
    min_value, max_value = -0.25, 0.5

    weight = jax.random.normal(k_w, (out_features, in_features), jnp.float32) * 0.5
    bias = jax.random.normal(k_b, (out_features,), jnp.float32) * 0.1

    def reference(x):
        y = x @ weight.T + bias
        y = jnp.maximum(y, min_value)
        y = jnp.minimum(y, max_value)
        return y

    # Small shape consistent with the module (last dim = in_features): jnp fast path.
    x_small = jax.random.normal(k1, (1, 3, in_features), jnp.float32)
    # Shapes that exercise the Pallas kernel (forced): 2 dense tiles on the grid,
    # and a ragged size that exercises the padding path.
    x_tiled = jax.random.normal(k2, (4, 1024, in_features), jnp.float32)
    x_ragged = jax.random.normal(k3, (2, 3000, in_features), jnp.float32)

    cases = [(x_small, None), (x_tiled, True), (x_ragged, True)]
    for x, force in cases:
        out = jax.block_until_ready(
            linear_clamp(x, weight, bias, min_value, max_value, use_pallas=force))
        ref = reference(x)
        assert out.shape == ref.shape
        assert jnp.allclose(out, ref, atol=1e-5, rtol=1e-5)

    print("KERNEL_OK")
</pallas_src>

<mosaic_0001>
module attributes {stable_mosaic.version = 11 : i64} {
  func.func @_linear_clamp_kernel(%arg0: i32, %arg1: memref<3x2xf32, #tpu.memory_space<smem>>, %arg2: memref<3xf32, #tpu.memory_space<smem>>, %arg3: memref<2x16x128xf32, #tpu.memory_space<vmem>>, %arg4: memref<3x16x128xf32, #tpu.memory_space<vmem>>) attributes {dimension_semantics = [#tpu.dimension_semantics<parallel>], iteration_bounds = array<i64: 2>, scalar_prefetch = 0 : i64, scratch_operands = 0 : i64, tpu.core_type = #tpu.core_type<tc>, window_params = [{transform_indices = @transform_0, window_bounds = array<i64: 3, 2>}, {transform_indices = @transform_1, window_bounds = array<i64: 3>}, {transform_indices = @transform_2, window_bounds = array<i64: 2, 16, 128>}, {transform_indices = @transform_3, window_bounds = array<i64: 3, 16, 128>}]} {
    %c0 = arith.constant 0 : index
    %c0_0 = arith.constant 0 : index
    %c0_1 = arith.constant 0 : index
    %0 = vector.load %arg3[%c0, %c0_0, %c0_1] : memref<2x16x128xf32, #tpu.memory_space<vmem>>, vector<1x16x128xf32>
    %1 = vector.shape_cast %0 : vector<1x16x128xf32> to vector<16x128xf32>
    %c1 = arith.constant 1 : index
    %c0_2 = arith.constant 0 : index
    %c0_3 = arith.constant 0 : index
    %2 = vector.load %arg3[%c1, %c0_2, %c0_3] : memref<2x16x128xf32, #tpu.memory_space<vmem>>, vector<1x16x128xf32>
    %3 = vector.shape_cast %2 : vector<1x16x128xf32> to vector<16x128xf32>
    %c0_4 = arith.constant 0 : index
    %c0_5 = arith.constant 0 : index
    %4 = memref.load %arg1[%c0_4, %c0_5] : memref<3x2xf32, #tpu.memory_space<smem>>
    %5 = vector.broadcast %4 : f32 to vector<16x128xf32>
    %6 = arith.mulf %1, %5 : vector<16x128xf32>
    %c0_6 = arith.constant 0 : index
    %7 = memref.load %arg2[%c0_6] : memref<3xf32, #tpu.memory_space<smem>>
    %8 = vector.broadcast %7 : f32 to vector<16x128xf32>
    %9 = arith.addf %6, %8 : vector<16x128xf32>
    %c0_7 = arith.constant 0 : index
    %c1_8 = arith.constant 1 : index
    %10 = memref.load %arg1[%c0_7, %c1_8] : memref<3x2xf32, #tpu.memory_space<smem>>
    %11 = vector.broadcast %10 : f32 to vector<16x128xf32>
    %12 = arith.mulf %3, %11 : vector<16x128xf32>
    %13 = arith.addf %9, %12 : vector<16x128xf32>
    %cst = arith.constant -2.500000e-01 : f32
    %14 = vector.broadcast %cst : f32 to vector<16x128xf32>
    %15 = arith.maximumf %13, %14 : vector<16x128xf32>
    %cst_9 = arith.constant 5.000000e-01 : f32
    %16 = vector.broadcast %cst_9 : f32 to vector<16x128xf32>
    %17 = arith.minimumf %15, %16 : vector<16x128xf32>
    %c0_10 = arith.constant 0 : index
    %c0_11 = arith.constant 0 : index
    %c0_12 = arith.constant 0 : index
    %18 = vector.load %arg4[%c0_10, %c0_11, %c0_12] : memref<3x16x128xf32, #tpu.memory_space<vmem>>, vector<1x16x128xf32>
    %19 = vector.shape_cast %18 : vector<1x16x128xf32> to vector<16x128xf32>
    %20 = vector.shape_cast %17 : vector<16x128xf32> to vector<1x16x128xf32>
    tpu.vector_store %arg4[%c0_10, %c0_11, %c0_12], %20 {strides = array<i32>} : memref<3x16x128xf32, #tpu.memory_space<vmem>>, vector<1x16x128xf32>,
    %c1_13 = arith.constant 1 : index
    %c0_14 = arith.constant 0 : index
    %21 = memref.load %arg1[%c1_13, %c0_14] : memref<3x2xf32, #tpu.memory_space<smem>>
    %22 = vector.broadcast %21 : f32 to vector<16x128xf32>
    %23 = arith.mulf %1, %22 : vector<16x128xf32>
    %c1_15 = arith.constant 1 : index
    %24 = memref.load %arg2[%c1_15] : memref<3xf32, #tpu.memory_space<smem>>
    %25 = vector.broadcast %24 : f32 to vector<16x128xf32>
    %26 = arith.addf %23, %25 : vector<16x128xf32>
    %c1_16 = arith.constant 1 : index
    %c1_17 = arith.constant 1 : index
    %27 = memref.load %arg1[%c1_16, %c1_17] : memref<3x2xf32, #tpu.memory_space<smem>>
    %28 = vector.broadcast %27 : f32 to vector<16x128xf32>
    %29 = arith.mulf %3, %28 : vector<16x128xf32>
    %30 = arith.addf %26, %29 : vector<16x128xf32>
    %cst_18 = arith.constant -2.500000e-01 : f32
    %31 = vector.broadcast %cst_18 : f32 to vector<16x128xf32>
    %32 = arith.maximumf %30, %31 : vector<16x128xf32>
    %cst_19 = arith.constant 5.000000e-01 : f32
    %33 = vector.broadcast %cst_19 : f32 to vector<16x128xf32>
    %34 = arith.minimumf %32, %33 : vector<16x128xf32>
    %c1_20 = arith.constant 1 : index
    %c0_21 = arith.constant 0 : index
    %c0_22 = arith.constant 0 : index
    %35 = vector.load %arg4[%c1_20, %c0_21, %c0_22] : memref<3x16x128xf32, #tpu.memory_space<vmem>>, vector<1x16x128xf32>
    %36 = vector.shape_cast %35 : vector<1x16x128xf32> to vector<16x128xf32>
    %37 = vector.shape_cast %34 : vector<16x128xf32> to vector<1x16x128xf32>
    tpu.vector_store %arg4[%c1_20, %c0_21, %c0_22], %37 {strides = array<i32>} : memref<3x16x128xf32, #tpu.memory_space<vmem>>, vector<1x16x128xf32>,
    %c2 = arith.constant 2 : index
    %c0_23 = arith.constant 0 : index
    %38 = memref.load %arg1[%c2, %c0_23] : memref<3x2xf32, #tpu.memory_space<smem>>
    %39 = vector.broadcast %38 : f32 to vector<16x128xf32>
    %40 = arith.mulf %1, %39 : vector<16x128xf32>
    %c2_24 = arith.constant 2 : index
    %41 = memref.load %arg2[%c2_24] : memref<3xf32, #tpu.memory_space<smem>>
    %42 = vector.broadcast %41 : f32 to vector<16x128xf32>
    %43 = arith.addf %40, %42 : vector<16x128xf32>
    %c2_25 = arith.constant 2 : index
    %c1_26 = arith.constant 1 : index
    %44 = memref.load %arg1[%c2_25, %c1_26] : memref<3x2xf32, #tpu.memory_space<smem>>
    %45 = vector.broadcast %44 : f32 to vector<16x128xf32>
    %46 = arith.mulf %3, %45 : vector<16x128xf32>
    %47 = arith.addf %43, %46 : vector<16x128xf32>
    %cst_27 = arith.constant -2.500000e-01 : f32
    %48 = vector.broadcast %cst_27 : f32 to vector<16x128xf32>
    %49 = arith.maximumf %47, %48 : vector<16x128xf32>
    %cst_28 = arith.constant 5.000000e-01 : f32
    %50 = vector.broadcast %cst_28 : f32 to vector<16x128xf32>
    %51 = arith.minimumf %49, %50 : vector<16x128xf32>
    %c2_29 = arith.constant 2 : index
    %c0_30 = arith.constant 0 : index
    %c0_31 = arith.constant 0 : index
    %52 = vector.load %arg4[%c2_29, %c0_30, %c0_31] : memref<3x16x128xf32, #tpu.memory_space<vmem>>, vector<1x16x128xf32>
    %53 = vector.shape_cast %52 : vector<1x16x128xf32> to vector<16x128xf32>
    %54 = vector.shape_cast %51 : vector<16x128xf32> to vector<1x16x128xf32>
    tpu.vector_store %arg4[%c2_29, %c0_30, %c0_31], %54 {strides = array<i32>} : memref<3x16x128xf32, #tpu.memory_space<vmem>>, vector<1x16x128xf32>,
    return
  }
  func.func @transform_0(%arg0: i32) -> (i32, i32) {
    %c0_i32 = arith.constant 0 : i32
    %c0_i32_0 = arith.constant 0 : i32
    %c0_i32_1 = arith.constant 0 : i32
    return %c0_i32, %c0_i32_0 : i32, i32
  }
  func.func @transform_1(%arg0: i32) -> i32 {
    %c0_i32 = arith.constant 0 : i32
    %c0_i32_0 = arith.constant 0 : i32
    return %c0_i32 : i32
  }
  func.func @transform_2(%arg0: i32) -> (i32, i32, i32) {
    %c0_i32 = arith.constant 0 : i32
    %c0_i32_0 = arith.constant 0 : i32
    %c0_i32_1 = arith.constant 0 : i32
    return %c0_i32, %arg0, %c0_i32_0 : i32, i32, i32
  }
  func.func @transform_3(%arg0: i32) -> (i32, i32, i32) {
    %c0_i32 = arith.constant 0 : i32
    %c0_i32_0 = arith.constant 0 : i32
    %c0_i32_1 = arith.constant 0 : i32
    return %c0_i32, %arg0, %c0_i32_0 : i32, i32, i32
  }
}

</mosaic_0001>

<llo_original>
// kernel: tpu_custom_call.1
$region0: #{tpu_custom_call.1}
  #allocation0 [shape = 'u32[]', space=smem, size = 0x4, offset = 0x4, fixed_abs, tag = 'smem constant byte address 0x4 - core index']
  #allocation1 [shape = 'u32[72,128]{1,0:T(1,128)}', space=vmem, size = 0x9000, scoped, tag = 'internal scratch']
  #allocation10 [shape = 's32[]', space=sflag, size = 0x4, offset = 0, fixed_abs, tag = 'sflag constant byte address 0x0 - dummy sync flag']
  #allocation12 [shape = 's32[]', space=sflag, size = 0x4, offset = 0, fixed_abs, tag = 'sflag constant byte address 0x0 - dummy sync flag']
  %s0 = inlined_call_operand.vmem [shape: f32[3,2], index: 0, kind: input, shape index: {}]
  %s1 = inlined_call_operand.vmem [shape: f32[3], index: 1, kind: input, shape index: {}]
  %s2 = inlined_call_operand.hbm [shape: f32[2,32,128], index: 2, kind: input, shape index: {}]
  %s3 = inlined_call_operand.hbm [shape: f32[3,32,128], index: 3, kind: output, shape index: {}]
  %s4 = sld [smem:[#allocation0]]
  $region57: #{tpu_custom_call.1} parent=0
    _
  %s6 = ssub.s32 1, %s4
  %s7 = scalar_select 0, %s6, %s4
  $region1: #{tpu_custom_call.1} parent=0
    #allocation2 [shape = 'u8[2048]{0}', space=smem, size = 0x800, scoped, tag = 'input window, operand 0, single buffered']
    #allocation3 [shape = 's32[2]{0}', space=sflag, size = 0x8, scoped, tag = 'scoped memory for tpu_custom_call.1']
    #allocation4 [shape = 's32[2]{0}', space=sflag, size = 0x8, scoped, tag = 'scoped memory for tpu_custom_call.1']
    #allocation5 [shape = 's32[2]{0}', space=sflag, size = 0x8, scoped, tag = 'scoped memory for tpu_custom_call.1']
    #allocation6 [shape = 'u8[512]{0}', space=smem, size = 0x200, scoped, tag = 'input window, operand 1, single buffered']
    #allocation7 [shape = 's32[1]{0}', space=sflag, size = 0x4, scoped, tag = 'scoped memory for tpu_custom_call.1']
    #allocation8 [shape = 'u8[32768]{0}', space=vmem, size = 0x8000, scoped, tag = 'input window, operand 2']
    #allocation9 [shape = 'u8[49152]{0}', space=vmem, size = 0xc000, scoped, tag = 'output window, operand 0']
    %8 = vsyncpa [#allocation5], 0
    %9 = vsyncpa [#allocation7], 0
    %10 = vsyncpa [#allocation3], 0
    %s11 = scalar_lea.sflag [#allocation3], 1
    %12 = vsyncpa %s11, 0
    %13 = vsyncpa [#allocation4], 0
    %s14 = scalar_lea.sflag [#allocation4], 1
    %15 = vsyncpa %s14, 0
    loop: start=0, step=1, limit=4
    $region2: #{tpu_custom_call.1} parent=1 // loop_pre_header
      _
    $region3: #{tpu_custom_call.1} parent=1 // loop_header
      %s17 = sphi 0, %s21
      %p18 = scmp.ge.s32.totalorder %s17, 4
      %s25 = sphi 0, %s25
      %s27 = sphi 0, %s25
      %s28 = sphi 0, %s27
      %s42 = sphi 0, %s28
      %s46 = sphi 0, %s46
      %s48 = sphi 0, %s46
      %s49 = sphi 0, %s48
      %s63 = sphi 0, %s49
      %s69 = sphi 0, %s71
      %s72 = sphi 0, %s69
      %s73 = sphi 0, %s72
      %s89 = sphi 0, %s73
      %s95 = sphi 0, %s97
      %s98 = sphi 0, %s95
      %s99 = sphi 0, %s98
      %s115 = sphi 0, %s99
    $region4: #{tpu_custom_call.1} parent=1 // loop_header_branch
      %20 = sbr.rel (%p18) target = $region8
    $region5: #{tpu_custom_call.1} parent=1 // loop_body
      %s22 = ssub.s32 %s17, 1
      %s23 = ssub.s32 %s17, 2
      %s24 = sadd.s32 %s17, 1
      %s26 = sadd.s32 %s25, 1
      %p29 = scmp.eq.s32.totalorder %s17, 1
      %p30 = scmp.ne.s32.totalorder %s25, %s27
      %p31 = scmp.eq.s32.totalorder %s17, 0
      %p32 = por %p30, %p31
      %p33 = scmp.ne.s32.totalorder %s25, %s27
      %p34 = scmp.eq.s32.totalorder %s22, 1
      %p35 = por %p33, %p34
      %p36 = scmp.ne.s32.totalorder %s27, %s28
      %p37 = scmp.eq.s32.totalorder %s22, 0
      %p38 = por %p36, %p37
      %p39 = scmp.ne.s32.totalorder %s27, %s28
      %p40 = scmp.eq.s32.totalorder %s23, 1
      %p41 = por %p39, %p40
      %p43 = scmp.ne.s32.totalorder %s28, %s42
      %p44 = scmp.eq.s32.totalorder %s23, 0
      %p45 = por %p43, %p44
      %s47 = sadd.s32 %s46, 1
      %p50 = scmp.eq.s32.totalorder %s17, 1
      %p51 = scmp.ne.s32.totalorder %s46, %s48
      %p52 = scmp.eq.s32.totalorder %s17, 0
      %p53 = por %p51, %p52
      %p54 = scmp.ne.s32.totalorder %s46, %s48
      %p55 = scmp.eq.s32.totalorder %s22, 1
      %p56 = por %p54, %p55
      %p57 = scmp.ne.s32.totalorder %s48, %s49
      %p58 = scmp.eq.s32.totalorder %s22, 0
      %p59 = por %p57, %p58
      %p60 = scmp.ne.s32.totalorder %s48, %s49
      %p61 = scmp.eq.s32.totalorder %s23, 1
      %p62 = por %p60, %p61
      %p64 = scmp.ne.s32.totalorder %s49, %s63
      %p65 = scmp.eq.s32.totalorder %s23, 0
      %p66 = por %p64, %p65
      %s67 = ssub.s32 %s17, %s24
      %p68 = scmp.eq.s32.totalorder %s67, 0
      %s70 = sadd.s32 %s69, 1
      %s71 = scalar_select %p68, %s69, %s70
      %p74 = pneg %p68
      %p75 = scmp.eq.s32.totalorder %s17, 1
      %p76 = por %p74, %p75
      %p77 = scmp.ne.s32.totalorder %s69, %s72
      %p78 = scmp.eq.s32.totalorder %s17, 0
      %p79 = por %p77, %p78
      %p80 = scmp.ne.s32.totalorder %s69, %s72
      %p81 = scmp.eq.s32.totalorder %s22, 1
      %p82 = por %p80, %p81
      %p83 = scmp.ne.s32.totalorder %s72, %s73
      %p84 = scmp.eq.s32.totalorder %s22, 0
      %p85 = por %p83, %p84
      %p86 = scmp.ne.s32.totalorder %s72, %s73
      %p87 = scmp.eq.s32.totalorder %s23, 1
      %p88 = por %p86, %p87
      %p90 = scmp.ne.s32.totalorder %s73, %s89
      %p91 = scmp.eq.s32.totalorder %s23, 0
      %p92 = por %p90, %p91
      %s93 = ssub.s32 %s17, %s24
      %p94 = scmp.eq.s32.totalorder %s93, 0
      %s96 = sadd.s32 %s95, 1
      %s97 = scalar_select %p94, %s95, %s96
      %p100 = pneg %p94
      %p101 = scmp.eq.s32.totalorder %s17, 1
      %p102 = por %p100, %p101
      %p103 = scmp.ne.s32.totalorder %s95, %s98
      %p104 = scmp.eq.s32.totalorder %s17, 0
      %p105 = por %p103, %p104
      %p106 = scmp.ne.s32.totalorder %s95, %s98
      %p107 = scmp.eq.s32.totalorder %s22, 1
      %p108 = por %p106, %p107
      %p109 = scmp.ne.s32.totalorder %s98, %s99
      %p110 = scmp.eq.s32.totalorder %s22, 0
      %p111 = por %p109, %p110
      %p112 = scmp.ne.s32.totalorder %s98, %s99
      %p113 = scmp.eq.s32.totalorder %s23, 1
      %p114 = por %p112, %p113
      %p116 = scmp.ne.s32.totalorder %s99, %s115
      %p117 = scmp.eq.s32.totalorder %s23, 0
      %p118 = por %p116, %p117
      %p119 = scmp.le.s32.totalorder 1, %s17
      %p120 = scmp.lt.s32.totalorder %s17, 3
      %p121 = pnand %p119, %p120
      %p122 = pneg %p121
      // Predicated region
      $region9: #{tpu_custom_call.1} parent=5 // pred_check
        _
      $region10: #{tpu_custom_call.1} parent=5 // pred_check_branch
        %124 = sbr.rel (%p121) target = $region12
      $region11: #{tpu_custom_call.1} parent=5 // pred_region
        %s125 = ssub.s32 %s17, 1
        // Predicated region
        $region13: #{tpu_custom_call.1} parent=11 // pred_check
          %p126 = pneg %p38
        $region14: #{tpu_custom_call.1} parent=11 // pred_check_branch
          %128 = sbr.rel (%p126) target = $region16
        $region15: #{tpu_custom_call.1} parent=11 // pred_region
          %130 = vsyncadd [#allocation5], 0
          %s132 = sshll.u32 %s0, 4
          %s133 = int_to_ptr.vmem [resolvable:$true] %s132
          %135 = dma.vmem_to_smem %s133, 64, [#allocation2], [#allocation5]
        $region16: #{tpu_custom_call.1} parent=11 // pred_fallthru
          _
        // Predicated region
        $region17: #{tpu_custom_call.1} parent=11 // pred_check
          %p136 = pneg %p59
        $region18: #{tpu_custom_call.1} parent=11 // pred_check_branch
          %138 = sbr.rel (%p136) target = $region20
        $region19: #{tpu_custom_call.1} parent=11 // pred_region
          %140 = vsyncadd [#allocation7], 0
          %s142 = sshll.u32 %s1, 4
          %s143 = int_to_ptr.vmem [resolvable:$true] %s142
          %145 = dma.vmem_to_smem %s143, 16, [#allocation6], [#allocation7]
        $region20: #{tpu_custom_call.1} parent=11 // pred_fallthru
          _
      $region12: #{tpu_custom_call.1} parent=5 // pred_fallthru
        _
      %p146 = scmp.lt.s32.totalorder %s17, 2
      // Predicated region
      $region21: #{tpu_custom_call.1} parent=5 // pred_check
        %p147 = pneg %p146
      $region22: #{tpu_custom_call.1} parent=5 // pred_check_branch
        %149 = sbr.rel (%p147) target = $region24
      $region23: #{tpu_custom_call.1} parent=5 // pred_region
        // Predicated region
        $region25: #{tpu_custom_call.1} parent=23 // pred_check
          %p150 = pneg %p79
        $region26: #{tpu_custom_call.1} parent=23 // pred_check_branch
          %152 = sbr.rel (%p150) target = $region28
        $region27: #{tpu_custom_call.1} parent=23 // pred_region
          #allocation11 [shape = 'u32[6]{0}', space=smem, size = 0x18, scoped, tag = 'DMA stride descriptor']
          %s153 = sand.u32 %s69, 1
          %s154 = scalar_lea.sflag [#allocation3], %s153
          %s155 = sand.u32 %s69, 1
          %s156 = smul.addr %s155, 32
          %s157 = scalar_lea.vmem [#allocation8], %s156
          %s158 = smul.u32 2, %s17
          %160 = vsyncadd %s154, 0
          %s161 = smul.addr %s158, 8
          %s162 = scalar_lea.hbm %s2, %s161
          %s164 = sshll.u32 1, 14
          %s165 = sxor.u32 4294967295, %s164
          %s167 = sld [smem:[#allocation0]]
          %s168 = sadd.s32 2, %s167
          %s170 = sshll.u32 7, 26
          %s171 = sxor.u32 4294967295, %s170
          %s172 = sand.u32 0, %s171
          %s173 = sshll.u32 %s168, 26
          %s174 = sor.u32 %s172, %s173
          %s175 = sshll.u32 %s162, 4
          %s176 = int_to_ptr.hbm [resolvable:$true] %s175
          %s177 = sshll.u32 %s157, 4
          %s178 = int_to_ptr.vmem [resolvable:$true] %s177
          %184 = sst [smem:[#allocation11]] 512
          %s185 = scalar_lea.smem [#allocation11], 1
          %186 = sst [smem:[%s185]] 256
          %s187 = scalar_lea.smem [#allocation11], 2
          %188 = sst [smem:[%s187]] 2
          %s189 = scalar_lea.smem [#allocation11], 3
          %190 = sst [smem:[%s189]] 128
          %s191 = scalar_lea.smem [#allocation11], 4
          %192 = sst [smem:[%s191]] 128
          %s193 = scalar_lea.smem [#allocation11], 5
          %194 = sst [smem:[%s193]] 8
          %196 = dma.general %s176, 512, %s178, %s154, [#allocation10], [#allocation11], %s174, 0
        $region28: #{tpu_custom_call.1} parent=23 // pred_fallthru
          _
      $region24: #{tpu_custom_call.1} parent=5 // pred_fallthru
        _
      %p197 = scmp.le.s32.totalorder 1, %s17
      %p198 = scmp.lt.s32.totalorder %s17, 3
      %p199 = pnand %p197, %p198
      %p200 = pneg %p199
      // Predicated region
      $region29: #{tpu_custom_call.1} parent=5 // pred_check
        _
      $region30: #{tpu_custom_call.1} parent=5 // pred_check_branch
        %202 = sbr.rel (%p199) target = $region32
      $region31: #{tpu_custom_call.1} parent=5 // pred_region
        %s203 = ssub.s32 %s17, 1
        // Predicated region
        $region33: #{tpu_custom_call.1} parent=31 // pred_check
          %p204 = pneg %p38
        $region34: #{tpu_custom_call.1} parent=31 // pred_check_branch
          %206 = sbr.rel (%p204) target = $region36
        $region35: #{tpu_custom_call.1} parent=31 // pred_region
          %208 = dma.done [#allocation5], 64
        $region36: #{tpu_custom_call.1} parent=31 // pred_fallthru
          _
        // Predicated region
        $region37: #{tpu_custom_call.1} parent=31 // pred_check
          %p209 = pneg %p59
        $region38: #{tpu_custom_call.1} parent=31 // pred_check_branch
          %211 = sbr.rel (%p209) target = $region40
        $region39: #{tpu_custom_call.1} parent=31 // pred_region
          %213 = dma.done [#allocation7], 16
        $region40: #{tpu_custom_call.1} parent=31 // pred_fallthru
          _
        %s214 = sand.u32 %s72, 1
        %s215 = scalar_lea.sflag [#allocation3], %s214
        %s216 = sand.u32 %s72, 1
        %s217 = smul.addr %s216, 32
        %s218 = scalar_lea.vmem [#allocation8], %s217
        // Predicated region
        $region41: #{tpu_custom_call.1} parent=31 // pred_check
          %p219 = pneg %p85
        $region42: #{tpu_custom_call.1} parent=31 // pred_check_branch
          %221 = sbr.rel (%p219) target = $region44
        $region43: #{tpu_custom_call.1} parent=31 // pred_region
          %223 = dma.done %s215, 512
        $region44: #{tpu_custom_call.1} parent=31 // pred_fallthru
          _
        %224 = sfence
        %p225 = pneg %p38
        %p226 = pneg %p35
        %p227 = pneg %p59
        %p228 = pneg %p56
        %s229 = sand.u32 %s72, 1
        %s230 = scalar_lea.sflag [#allocation3], %s229
        %s231 = sand.u32 %s72, 1
        %s232 = smul.addr %s231, 32
        %s233 = scalar_lea.vmem [#allocation8], %s232
        %p234 = pneg %p85
        %p235 = pneg %p82
        %p236 = pneg %p111
        %p237 = pneg %p108
        %s238 = sand.u32 %s98, 1
        %s239 = scalar_lea.sflag [#allocation4], %s238
        %s240 = sand.u32 %s98, 1
        %s241 = smul.addr %s240, 48
        %s242 = scalar_lea.vmem [#allocation9], %s241
        %s243 = smul.u32 2, %s22
        %s244 = smul.u32 2, %s22
        %v245 = vld [vmem:[%s218] sm:$0xff]
        %v246 = vld [vmem:[%s218 + $0x8] sm:$0xff]
        %s247 = scalar_lea.vmem %s218, 16 [#allocation8]
        %v248 = vld [vmem:[%s247] sm:$0xff]
        %v249 = vld [vmem:[%s247 + $0x8] sm:$0xff]
        %s250 = sld [smem:[#allocation2]]
        %v251 = vstv %s250
        %v252 = vmul.f32 %v245, %v251
        %v253 = vmul.f32 %v246, %v251
        %s254 = sld [smem:[#allocation6]]
        %v255 = vstv %s254
        %v256 = vadd.f32 %v252, %v255
        %v257 = vadd.f32 %v253, %v255
        %s258 = sld [smem:[#allocation2 + $0x1]]
        %v259 = vstv %s258
        %v260 = vmul.f32 %v248, %v259
        %v261 = vmul.f32 %v249, %v259
        %v262 = vadd.f32 %v256, %v260
        %v263 = vadd.f32 %v257, %v261
        %v264 = vmax.f32 %v262, -0.25
        %v265 = vmax.f32 %v263, -0.25
        %v266 = vmin.f32 %v264, 0.5
        %v267 = vmin.f32 %v265, 0.5
        %268 = vst [vmem:[%s242] sm:$0xff] %v266
        %269 = vst [vmem:[%s242 + $0x8] sm:$0xff] %v267
        %s270 = sld [smem:[#allocation2 + $0x80]]
        %v271 = vstv %s270
        %v272 = vmul.f32 %v245, %v271
        %v273 = vmul.f32 %v246, %v271
        %s274 = sld [smem:[#allocation6 + $0x1]]
        %v275 = vstv %s274
        %v276 = vadd.f32 %v272, %v275
        %v277 = vadd.f32 %v273, %v275
        %s278 = sld [smem:[#allocation2 + $0x81]]
        %v279 = vstv %s278
        %v280 = vmul.f32 %v248, %v279
        %v281 = vmul.f32 %v249, %v279
        %v282 = vadd.f32 %v276, %v280
        %v283 = vadd.f32 %v277, %v281
        %v284 = vmax.f32 %v282, -0.25
        %v285 = vmax.f32 %v283, -0.25
        %v286 = vmin.f32 %v284, 0.5
        %v287 = vmin.f32 %v285, 0.5
        %s288 = scalar_lea.vmem %s242, 16 [#allocation9]
        %289 = vst [vmem:[%s288] sm:$0xff] %v286
        %290 = vst [vmem:[%s288 + $0x8] sm:$0xff] %v287
        %s291 = sld [smem:[#allocation2 + $0x100]]
        %v292 = vstv %s291
        %v293 = vmul.f32 %v245, %v292
        %v294 = vmul.f32 %v246, %v292
        %s295 = sld [smem:[#allocation6 + $0x2]]
        %v296 = vstv %s295
        %v297 = vadd.f32 %v293, %v296
        %v298 = vadd.f32 %v294, %v296
        %s299 = sld [smem:[#allocation2 + $0x101]]
        %v300 = vstv %s299
        %v301 = vmul.f32 %v248, %v300
        %v302 = vmul.f32 %v249, %v300
        %v303 = vadd.f32 %v297, %v301
        %v304 = vadd.f32 %v298, %v302
        %v305 = vmax.f32 %v303, -0.25
        %v306 = vmax.f32 %v304, -0.25
        %v307 = vmin.f32 %v305, 0.5
        %v308 = vmin.f32 %v306, 0.5
        %s309 = scalar_lea.vmem %s242, 32 [#allocation9]
        %310 = vst [vmem:[%s309] sm:$0xff] %v307
        %311 = vst [vmem:[%s309 + $0x8] sm:$0xff] %v308
        %s312 = sand.u32 %s98, 1
        %s313 = scalar_lea.sflag [#allocation4], %s312
        %s314 = sand.u32 %s98, 1
        %s315 = smul.addr %s314, 48
        %s316 = scalar_lea.vmem [#allocation9], %s315
        // Predicated region
        $region45: #{tpu_custom_call.1} parent=31 // pred_check
          %p317 = pneg %p108
        $region46: #{tpu_custom_call.1} parent=31 // pred_check_branch
          %319 = sbr.rel (%p317) target = $region48
        $region47: #{tpu_custom_call.1} parent=31 // pred_region
          #allocation13 [shape = 'u32[6]{0}', space=smem, size = 0x18, scoped, tag = 'DMA stride descriptor']
          %s320 = smul.u32 2, %s22
          %322 = vsyncadd %s313, 0
          %s323 = smul.addr %s320, 8
          %s324 = scalar_lea.hbm %s3, %s323
          %s326 = sshll.u32 1, 14
          %s327 = sxor.u32 4294967295, %s326
          %s330 = sshll.u32 7, 18
          %s331 = sxor.u32 4294967295, %s330
          %s332 = sand.u32 0, %s331
          %s334 = sor.u32 %s332, 0
          %s335 = sshll.u32 %s316, 4
          %s336 = int_to_ptr.vmem [resolvable:$true] %s335
          %s337 = sshll.u32 %s324, 4
          %s338 = int_to_ptr.hbm [resolvable:$true] %s337
          %344 = sst [smem:[#allocation13]] 256
          %s345 = scalar_lea.smem [#allocation13], 1
          %346 = sst [smem:[%s345]] 512
          %s347 = scalar_lea.smem [#allocation13], 2
          %348 = sst [smem:[%s347]] 2
          %s349 = scalar_lea.smem [#allocation13], 3
          %350 = sst [smem:[%s349]] 128
          %s351 = scalar_lea.smem [#allocation13], 4
          %352 = sst [smem:[%s351]] 128
          %s353 = scalar_lea.smem [#allocation13], 5
          %354 = sst [smem:[%s353]] 8
          %356 = dma.general %s336, 768, %s338, %s313, [#allocation12], [#allocation13], %s334, 0
        $region48: #{tpu_custom_call.1} parent=31 // pred_fallthru
          _
      $region32: #{tpu_custom_call.1} parent=5 // pred_fallthru
        _
      %p357 = scmp.le.s32.totalorder 2, %s17
      // Predicated region
      $region49: #{tpu_custom_call.1} parent=5 // pred_check
        %p358 = pneg %p357
      $region50: #{tpu_custom_call.1} parent=5 // pred_check_branch
        %360 = sbr.rel (%p358) target = $region52
      $region51: #{tpu_custom_call.1} parent=5 // pred_region
        %s361 = ssub.s32 %s17, 2
        // Predicated region
        $region53: #{tpu_custom_call.1} parent=51 // pred_check
          %p362 = pneg %p114
        $region54: #{tpu_custom_call.1} parent=51 // pred_check_branch
          %364 = sbr.rel (%p362) target = $region56
        $region55: #{tpu_custom_call.1} parent=51 // pred_region
          %s365 = sand.u32 %s99, 1
          %s366 = scalar_lea.sflag [#allocation4], %s365
          %s367 = sand.u32 %s99, 1
          %s368 = smul.addr %s367, 48
          %s369 = scalar_lea.vmem [#allocation9], %s368
          %371 = dma.done %s366, 768
        $region56: #{tpu_custom_call.1} parent=51 // pred_fallthru
          _
      $region52: #{tpu_custom_call.1} parent=5 // pred_fallthru
        _
    $region6: #{tpu_custom_call.1} parent=1 // loop_footer
      %s21 = sadd.s32 1, %s17
    $region7: #{tpu_custom_call.1} parent=1 // loop_footer_branch
      %16 = sbr.rel target = $region3
    $region8: #{tpu_custom_call.1} parent=1 // loop_exit
      _
    %372 = vsyncpa [#allocation3], 1
    %s373 = scalar_lea.sflag [#allocation3], 1
    %374 = vsyncpa %s373, 1
    %375 = vsyncpa [#allocation4], 1
    %s376 = scalar_lea.sflag [#allocation4], 1
    %377 = vsyncpa %s376, 1
    %378 = vsyncpa [#allocation5], 1
    %s379 = scalar_lea.sflag [#allocation5], 1
    %380 = vsyncpa %s379, 1
    %381 = vsyncpa [#allocation7], 1

</llo_original>
